<compile_context>
chip_gen: v5e
topology: v5e:2x2
jax: 0.10.0
libtpu: 0.0.40
codegen_flags: <defaults>
</compile_context>

<pallas_src>
import functools

import jax
import jax.numpy as jnp
from jax.experimental import pallas as pl
from jax.experimental.pallas import tpu as pltpu


def _round_up(a, b):
    return ((a + b - 1) // b) * b


def _cdiv(a, b):
    return (a + b - 1) // b


# ----------------------------------------------------------------------------
# Pallas kernel
# ----------------------------------------------------------------------------
def _mmilb_kernel(x_ref, y_ref,
                  w1_ref, b1_ref, w2_ref, b2_ref,
                  wp_ref, bp_ref,
                  part_ref, yprj_ref,
                  *, y_size, y_pad, batch_size, tile_b, fuse_l2):
    i = pl.program_id(0)

    x = x_ref[...].astype(jnp.bfloat16)   # f32 stream -> bf16 cast on VPU (free slack)
    y_f32 = y_ref[...]                    # (tile_b, y_size) f32

    # ---- fused first layer: [h_mu | h_logvar] in a single MXU pass ---------
    h = jnp.dot(x, w1_ref[...], preferred_element_type=jnp.float32) + b1_ref[...]
    h = jnp.maximum(h, 0.0).astype(jnp.bfloat16)

    # ---- second layer -> [mu | logvar], each half lane-padded to y_pad -----
    if fuse_l2:
        # block-diagonal fused weight: one MXU push
        z = jnp.dot(h, w2_ref[...], preferred_element_type=jnp.float32) + b2_ref[...]
    else:
        # fused width would exceed one MXU tile -> two separate dots
        w2 = w2_ref[...]
        z = jnp.concatenate(
            [jnp.dot(h[:, :y_size], w2[:, :y_pad],
                     preferred_element_type=jnp.float32),
             jnp.dot(h[:, y_size:], w2[:, y_pad:],
                     preferred_element_type=jnp.float32)],
            axis=-1) + b2_ref[...]

    mu = z[:, :y_size]                       # starts at lane 0
    logvar = z[:, y_pad:y_pad + y_size]      # starts at lane y_pad (128-aligned)

    # ---- gaussian log-likelihood term ---------------------------------------
    diff = mu - y_f32
    positive = -(diff * diff) * 0.5 * jnp.exp(-logvar)

    # mask grid-padding rows out of the reduction
    row = i * tile_b + jax.lax.broadcasted_iota(jnp.int32, (tile_b, 1), 0)
    positive = jnp.where(row < batch_size, positive, 0.0)

    # per-tile partial sums: collapse tile_b rows to 8 sublanes via static
    # vreg-group adds (pure VPU, no XLU / no cross-step state)
    groups = tile_b // 8
    acc = positive[0:8, :]
    for g in range(1, groups):
        acc = acc + positive[8 * g:8 * (g + 1), :]
    part_ref[...] = acc

    # ---- entropy projection: Linear -> Tanh, lane-dense bf16 output --------
    y_bf16 = y_f32.astype(jnp.bfloat16)
    prj = jnp.dot(y_bf16, wp_ref[...], preferred_element_type=jnp.float32) + bp_ref[...]
    yprj_ref[...] = jnp.tanh(prj).astype(jnp.bfloat16)


# ----------------------------------------------------------------------------
# Parameter packing (done once)
# ----------------------------------------------------------------------------
def pack_params(params):
    """Fuse/pack the module weights (bf16 MXU operands, f32 biases)."""
    x_size, y_size = params["w1m"].shape
    prj = params["wp"].shape[1]
    prj_pad = _round_up(prj, 128)
    y_pad = _round_up(y_size, 128)
    fuse_l2 = (2 * y_pad) <= 256   # fused blockdiag only while it fits one MXU tile

    w1 = jnp.concatenate([params["w1m"], params["w1v"]], axis=1).astype(jnp.bfloat16)
    b1 = jnp.concatenate([params["b1m"], params["b1v"]], axis=1)

    if fuse_l2:
        w2 = jnp.zeros((2 * y_size, 2 * y_pad), jnp.float32)
        w2 = w2.at[:y_size, :y_size].set(params["w2m"])
        w2 = w2.at[y_size:, y_pad:y_pad + y_size].set(params["w2v"])
    else:
        w2 = jnp.zeros((y_size, 2 * y_pad), jnp.float32)
        w2 = w2.at[:, :y_size].set(params["w2m"])
        w2 = w2.at[:, y_pad:y_pad + y_size].set(params["w2v"])
    w2 = w2.astype(jnp.bfloat16)

    b2 = jnp.zeros((1, 2 * y_pad), jnp.float32)
    b2 = b2.at[:, :y_size].set(params["b2m"])
    b2 = b2.at[:, y_pad:y_pad + y_size].set(params["b2v"])

    wp = (jnp.zeros((y_size, prj_pad), jnp.float32)
          .at[:, :prj].set(params["wp"]).astype(jnp.bfloat16))
    bp = jnp.zeros((1, prj_pad), jnp.float32).at[:, :prj].set(params["bp"])

    return {
        "w1": w1, "b1": b1, "w2": w2, "b2": b2, "wp": wp, "bp": bp,
        "x_size": x_size, "y_size": y_size, "y_pad": y_pad,
        "prj": prj, "prj_pad": prj_pad, "fuse_l2": fuse_l2,
    }


# ----------------------------------------------------------------------------
# Wrapper (hot path)
# ----------------------------------------------------------------------------
def mmilb_pallas(x, y, packed):
    """Fused MLPs + gaussian lld + entropy projection.

    Returns (lld scalar, padded bf16 y_prj buffer (bs_pad, prj_pad));
    the consumer slices y_prj lazily.
    """
    bs, x_size = x.shape
    y_size = packed["y_size"]
    y_pad = packed["y_pad"]
    prj_pad = packed["prj_pad"]
    fuse_l2 = packed["fuse_l2"]

    # batch tiling: tiles sized to the batch (cap 512), rounded to 16 rows
    CAP = 512
    num_tiles = _cdiv(bs, CAP)
    tile_b = _round_up(_cdiv(bs, num_tiles), 16)
    bs_pad = num_tiles * tile_b

    x_in, y_in = x, y
    if bs_pad != bs:
        x_in = jnp.pad(x_in, ((0, bs_pad - bs), (0, 0)))
        y_in = jnp.pad(y_in, ((0, bs_pad - bs), (0, 0)))

    w2_rows = 2 * y_size if fuse_l2 else y_size

    kernel = functools.partial(_mmilb_kernel,
                               y_size=y_size, y_pad=y_pad,
                               batch_size=bs, tile_b=tile_b, fuse_l2=fuse_l2)

    partials, y_prj = pl.pallas_call(
        kernel,
        out_shape=(jax.ShapeDtypeStruct((num_tiles * 8, y_size), jnp.float32),
                   jax.ShapeDtypeStruct((bs_pad, prj_pad), jnp.bfloat16)),
        grid=(num_tiles,),
        in_specs=[
            pl.BlockSpec((tile_b, x_size), lambda i: (i, 0)),          # x tile (f32)
            pl.BlockSpec((tile_b, y_size), lambda i: (i, 0)),          # y tile (f32)
            pl.BlockSpec((x_size, 2 * y_size), lambda i: (0, 0)),      # w1 (resident)
            pl.BlockSpec((1, 2 * y_size), lambda i: (0, 0)),           # b1
            pl.BlockSpec((w2_rows, 2 * y_pad), lambda i: (0, 0)),      # w2 (padded)
            pl.BlockSpec((1, 2 * y_pad), lambda i: (0, 0)),            # b2
            pl.BlockSpec((y_size, prj_pad), lambda i: (0, 0)),         # wp (padded)
            pl.BlockSpec((1, prj_pad), lambda i: (0, 0)),              # bp
        ],
        out_specs=(
            pl.BlockSpec((8, y_size), lambda i: (i, 0)),               # lld partials
            pl.BlockSpec((tile_b, prj_pad), lambda i: (i, 0)),         # y_prj (bf16)
        ),
        compiler_params=pltpu.CompilerParams(
            # per-tile partial sums are independent -> fully parallel grid
            # (v7x megacore shards the batch across both TensorCores)
            dimension_semantics=("parallel",)),
    )(x_in, y_in,
      packed["w1"], packed["b1"], packed["w2"], packed["b2"],
      packed["wp"], packed["bp"])

    lld = jnp.sum(partials) / jnp.float32(bs)
    return lld, y_prj


# ----------------------------------------------------------------------------
# Plain-JAX glue reproducing full forward() semantics.
# ----------------------------------------------------------------------------
def mmilb_forward(x, y, packed, labels=None, mem=None):
    lld, y_prj_pad = mmilb_pallas(x, y, packed)
    bs = x.shape[0]
    prj = packed["prj"]

    H = 0.0
    sample_dict = {"pos": None, "neg": None}

    if labels is not None:
        lab = jnp.squeeze(labels)
        # slice the padded bf16 buffer lazily at the consumer, cast back to f32
        y_prj = y_prj_pad[:bs, :prj].astype(jnp.float32)
        # data-dependent (dynamically shaped) boolean gather -> eager JAX glue
        pos_y = y_prj[lab > 0]
        neg_y = y_prj[lab < 0]
        sample_dict["pos"] = pos_y
        sample_dict["neg"] = neg_y

        if mem is not None and mem.get("pos", None) is not None:
            # TODO(synk): logdet / history accumulation has no clean Pallas
            # equivalent (dynamic shapes, LU decomposition); done in plain JAX.
            pos_all = jnp.concatenate(mem["pos"] + [pos_y], axis=0)
            neg_all = jnp.concatenate(mem["neg"] + [neg_y], axis=0)
            mu_pos = pos_all.mean(axis=0)
            mu_neg = neg_all.mean(axis=0)
            dp = pos_all - mu_pos
            dn = neg_all - mu_neg
            sigma_pos = jnp.mean(dp[:, :, None] * dp[:, None, :], axis=0)
            sigma_neg = jnp.mean(dn[:, :, None] * dn[:, None, :], axis=0)
            sp = jnp.linalg.slogdet(sigma_pos)
            sn = jnp.linalg.slogdet(sigma_neg)
            H = 0.25 * (sp[0] * sp[1] + sn[0] * sn[1])

    return lld, sample_dict, H


# ----------------------------------------------------------------------------
# Pure-JAX reference (f32) for a correctness sanity check.
# ----------------------------------------------------------------------------
def _reference(x, y, params):
    h_mu = jnp.maximum(x @ params["w1m"] + params["b1m"], 0.0)
    mu = h_mu @ params["w2m"] + params["b2m"]
    h_lv = jnp.maximum(x @ params["w1v"] + params["b1v"], 0.0)
    logvar = h_lv @ params["w2v"] + params["b2v"]
    positive = -(mu - y) ** 2 / 2.0 / jnp.exp(logvar)
    lld = jnp.mean(jnp.sum(positive, -1))
    y_prj = jnp.tanh(y @ params["wp"] + params["bp"])
    return lld, y_prj


# ----------------------------------------------------------------------------
# Deterministic parameter init (matches nn.Linear shapes of the module).
# ----------------------------------------------------------------------------
def init_params(key, x_size, y_size):
    ks = jax.random.split(key, 12)
    s = 0.1
    prj = y_size // 4
    return {
        # mlp_mu
        "w1m": s * jax.random.normal(ks[0], (x_size, y_size), jnp.float32),
        "b1m": s * jax.random.normal(ks[1], (1, y_size), jnp.float32),
        "w2m": s * jax.random.normal(ks[2], (y_size, y_size), jnp.float32),
        "b2m": s * jax.random.normal(ks[3], (1, y_size), jnp.float32),
        # mlp_logvar
        "w1v": s * jax.random.normal(ks[4], (x_size, y_size), jnp.float32),
        "b1v": s * jax.random.normal(ks[5], (1, y_size), jnp.float32),
        "w2v": s * jax.random.normal(ks[6], (y_size, y_size), jnp.float32),
        "b2v": s * jax.random.normal(ks[7], (1, y_size), jnp.float32),
        # entropy_prj
        "wp": s * jax.random.normal(ks[8], (y_size, prj), jnp.float32),
        "bp": s * jax.random.normal(ks[9], (1, prj), jnp.float32),
    }


if __name__ == "__main__":
    key = jax.random.PRNGKey(0)
    kx, ky, kl, kp = jax.random.split(key, 4)

    bs, x_size, y_size = 8, 32, 32
    x = jax.random.normal(kx, (bs, x_size), jnp.float32)
    y = jax.random.normal(ky, (bs, y_size), jnp.float32)
    labels = jax.random.normal(kl, (bs, 1), jnp.float32)  # mixed-sign sentiment labels

    params = init_params(kp, x_size, y_size)
    packed = pack_params(params)

    lld, sample_dict, H = mmilb_forward(x, y, packed, labels=labels, mem=None)
    jax.block_until_ready(lld)
    if sample_dict["pos"] is not None:
        jax.block_until_ready(sample_dict["pos"])
    if sample_dict["neg"] is not None:
        jax.block_until_ready(sample_dict["neg"])

    # sanity check against pure-JAX f32 reference (bf16 MXU operands -> loose tol)
    lld_ref, yprj_ref = _reference(x, y, params)
    lld_k, yprj_pad_k = mmilb_pallas(x, y, packed)
    yprj_k = yprj_pad_k[:bs, :packed["prj"]].astype(jnp.float32)
    assert jnp.abs(lld_k - lld_ref) < 0.5, (lld_k, lld_ref)
    assert jnp.max(jnp.abs(yprj_k - yprj_ref)) < 0.05

    print("KERNEL_OK")
</pallas_src>

<mosaic_0001>
module attributes {stable_mosaic.version = 11 : i64} {
  func.func @_mmilb_kernel(%arg0: i32, %arg1: memref<16x32xf32, #tpu.memory_space<vmem>>, %arg2: memref<16x32xf32, #tpu.memory_space<vmem>>, %arg3: memref<32x64xbf16, #tpu.memory_space<vmem>>, %arg4: memref<1x64xf32, #tpu.memory_space<vmem>>, %arg5: memref<64x256xbf16, #tpu.memory_space<vmem>>, %arg6: memref<1x256xf32, #tpu.memory_space<vmem>>, %arg7: memref<32x128xbf16, #tpu.memory_space<vmem>>, %arg8: memref<1x128xf32, #tpu.memory_space<vmem>>, %arg9: memref<8x32xf32, #tpu.memory_space<vmem>>, %arg10: memref<16x128xbf16, #tpu.memory_space<vmem>>) attributes {dimension_semantics = [#tpu.dimension_semantics<parallel>], iteration_bounds = array<i64: 1>, scalar_prefetch = 0 : i64, scratch_operands = 0 : i64, tpu.core_type = #tpu.core_type<tc>, window_params = [{transform_indices = @transform_0, window_bounds = array<i64: 16, 32>}, {transform_indices = @transform_1, window_bounds = array<i64: 16, 32>}, {pipeline_mode = #tpu.pipeline_mode<synchronous>, transform_indices = @transform_2, window_bounds = array<i64: 32, 64>}, {pipeline_mode = #tpu.pipeline_mode<synchronous>, transform_indices = @transform_3, window_bounds = array<i64: 1, 64>}, {pipeline_mode = #tpu.pipeline_mode<synchronous>, transform_indices = @transform_4, window_bounds = array<i64: 64, 256>}, {pipeline_mode = #tpu.pipeline_mode<synchronous>, transform_indices = @transform_5, window_bounds = array<i64: 1, 256>}, {pipeline_mode = #tpu.pipeline_mode<synchronous>, transform_indices = @transform_6, window_bounds = array<i64: 32, 128>}, {pipeline_mode = #tpu.pipeline_mode<synchronous>, transform_indices = @transform_7, window_bounds = array<i64: 1, 128>}, {transform_indices = @transform_8, window_bounds = array<i64: 8, 32>}, {transform_indices = @transform_9, window_bounds = array<i64: 16, 128>}]} {
    %c0 = arith.constant 0 : index
    %c0_0 = arith.constant 0 : index
    %0 = vector.load %arg1[%c0, %c0_0] : memref<16x32xf32, #tpu.memory_space<vmem>>, vector<16x32xf32>
    %1 = arith.truncf %0 : vector<16x32xf32> to vector<16x32xbf16>
    %c0_1 = arith.constant 0 : index
    %c0_2 = arith.constant 0 : index
    %2 = vector.load %arg2[%c0_1, %c0_2] : memref<16x32xf32, #tpu.memory_space<vmem>>, vector<16x32xf32>
    %c0_3 = arith.constant 0 : index
    %c0_4 = arith.constant 0 : index
    %3 = vector.load %arg3[%c0_3, %c0_4] : memref<32x64xbf16, #tpu.memory_space<vmem>>, vector<32x64xbf16>
    %cst = arith.constant dense<0.000000e+00> : vector<16x64xf32>
    %4 = tpu.matmul %1, %3, %cst {dimension_numbers = #tpu.dot_dimension_numbers<[1], [0], [0], [1], [0, 0, 1, 1], [], []>} : vector<16x32xbf16>, vector<32x64xbf16>, vector<16x64xf32> -> vector<16x64xf32>
    %c0_5 = arith.constant 0 : index
    %c0_6 = arith.constant 0 : index
    %5 = vector.load %arg4[%c0_5, %c0_6] : memref<1x64xf32, #tpu.memory_space<vmem>>, vector<1x64xf32>
    %6 = vector.broadcast %5 : vector<1x64xf32> to vector<16x64xf32>
    %7 = arith.addf %4, %6 : vector<16x64xf32>
    %cst_7 = arith.constant 0.000000e+00 : f32
    %8 = vector.broadcast %cst_7 : f32 to vector<16x64xf32>
    %9 = arith.maximumf %7, %8 : vector<16x64xf32>
    %10 = arith.truncf %9 : vector<16x64xf32> to vector<16x64xbf16>
    %c0_8 = arith.constant 0 : index
    %c0_9 = arith.constant 0 : index
    %11 = vector.load %arg5[%c0_8, %c0_9] : memref<64x256xbf16, #tpu.memory_space<vmem>>, vector<64x256xbf16>
    %cst_10 = arith.constant dense<0.000000e+00> : vector<16x256xf32>
    %12 = tpu.matmul %10, %11, %cst_10 {dimension_numbers = #tpu.dot_dimension_numbers<[1], [0], [0], [1], [0, 0, 1, 1], [], []>} : vector<16x64xbf16>, vector<64x256xbf16>, vector<16x256xf32> -> vector<16x256xf32>
    %c0_11 = arith.constant 0 : index
    %c0_12 = arith.constant 0 : index
    %13 = vector.load %arg6[%c0_11, %c0_12] : memref<1x256xf32, #tpu.memory_space<vmem>>, vector<1x256xf32>
    %14 = vector.broadcast %13 : vector<1x256xf32> to vector<16x256xf32>
    %15 = arith.addf %12, %14 : vector<16x256xf32>
    %16 = vector.extract_strided_slice %15 {offsets = [0, 0], sizes = [16, 32], strides = [1, 1]} : vector<16x256xf32> to vector<16x32xf32>
    %17 = vector.extract_strided_slice %15 {offsets = [0, 128], sizes = [16, 32], strides = [1, 1]} : vector<16x256xf32> to vector<16x32xf32>
    %18 = arith.subf %16, %2 : vector<16x32xf32>
    %19 = arith.mulf %18, %18 : vector<16x32xf32>
    %cst_13 = arith.constant 0.000000e+00 : f32
    %20 = vector.broadcast %cst_13 : f32 to vector<16x32xf32>
    %21 = arith.subf %20, %19 : vector<16x32xf32>
    %cst_14 = arith.constant 5.000000e-01 : f32
    %22 = vector.broadcast %cst_14 : f32 to vector<16x32xf32>
    %23 = arith.mulf %21, %22 : vector<16x32xf32>
    %cst_15 = arith.constant 0.000000e+00 : f32
    %24 = vector.broadcast %cst_15 : f32 to vector<16x32xf32>
    %25 = arith.subf %24, %17 : vector<16x32xf32>
    %26 = math.exp %25 : vector<16x32xf32>
    %27 = arith.mulf %23, %26 : vector<16x32xf32>
    %c16_i32 = arith.constant 16 : i32
    %28 = arith.muli %arg0, %c16_i32 : i32
    %29 = tpu.iota {dimensions = array<i32: 0>} : vector<16x1xi32>
    %30 = vector.broadcast %28 : i32 to vector<16x1xi32>
    %31 = arith.addi %30, %29 : vector<16x1xi32>
    %c8_i32 = arith.constant 8 : i32
    %32 = vector.broadcast %c8_i32 : i32 to vector<16x1xi32>
    %33 = arith.cmpi slt, %31, %32 : vector<16x1xi32>
    %cst_16 = arith.constant 0.000000e+00 : f32
    %34 = vector.shape_cast %33 : vector<16x1xi1> to vector<16x1xi1>
    %35 = vector.broadcast %34 : vector<16x1xi1> to vector<16x32xi1>
    %36 = vector.broadcast %cst_16 : f32 to vector<16x32xf32>
    %37 = arith.select %35, %27, %36 : vector<16x32xi1>, vector<16x32xf32>
    %38 = vector.extract_strided_slice %37 {offsets = [0, 0], sizes = [8, 32], strides = [1, 1]} : vector<16x32xf32> to vector<8x32xf32>
    %39 = vector.extract_strided_slice %37 {offsets = [8, 0], sizes = [8, 32], strides = [1, 1]} : vector<16x32xf32> to vector<8x32xf32>
    %40 = arith.addf %38, %39 : vector<8x32xf32>
    %c0_17 = arith.constant 0 : index
    %c0_18 = arith.constant 0 : index
    %41 = vector.load %arg9[%c0_17, %c0_18] : memref<8x32xf32, #tpu.memory_space<vmem>>, vector<8x32xf32>
    tpu.vector_store %arg9[%c0_17, %c0_18], %40 {strides = array<i32>} : memref<8x32xf32, #tpu.memory_space<vmem>>, vector<8x32xf32>,
    %42 = arith.truncf %2 : vector<16x32xf32> to vector<16x32xbf16>
    %c0_19 = arith.constant 0 : index
    %c0_20 = arith.constant 0 : index
    %43 = vector.load %arg7[%c0_19, %c0_20] : memref<32x128xbf16, #tpu.memory_space<vmem>>, vector<32x128xbf16>
    %cst_21 = arith.constant dense<0.000000e+00> : vector<16x128xf32>
    %44 = tpu.matmul %42, %43, %cst_21 {dimension_numbers = #tpu.dot_dimension_numbers<[1], [0], [0], [1], [0, 0, 1, 1], [], []>} : vector<16x32xbf16>, vector<32x128xbf16>, vector<16x128xf32> -> vector<16x128xf32>
    %c0_22 = arith.constant 0 : index
    %c0_23 = arith.constant 0 : index
    %45 = vector.load %arg8[%c0_22, %c0_23] : memref<1x128xf32, #tpu.memory_space<vmem>>, vector<1x128xf32>
    %46 = vector.broadcast %45 : vector<1x128xf32> to vector<16x128xf32>
    %47 = arith.addf %44, %46 : vector<16x128xf32>
    %48 = math.tanh %47 : vector<16x128xf32>
    %49 = arith.truncf %48 : vector<16x128xf32> to vector<16x128xbf16>
    %c0_24 = arith.constant 0 : index
    %c0_25 = arith.constant 0 : index
    %50 = vector.load %arg10[%c0_24, %c0_25] : memref<16x128xbf16, #tpu.memory_space<vmem>>, vector<16x128xbf16>
    tpu.vector_store %arg10[%c0_24, %c0_25], %49 {strides = array<i32>} : memref<16x128xbf16, #tpu.memory_space<vmem>>, vector<16x128xbf16>,
    return
  }
  func.func @transform_0(%arg0: i32) -> (i32, i32) {
    %c0_i32 = arith.constant 0 : i32
    %c0_i32_0 = arith.constant 0 : i32
    return %arg0, %c0_i32 : i32, i32
  }
  func.func @transform_1(%arg0: i32) -> (i32, i32) {
    %c0_i32 = arith.constant 0 : i32
    %c0_i32_0 = arith.constant 0 : i32
    return %arg0, %c0_i32 : i32, i32
  }
  func.func @transform_2(%arg0: i32) -> (i32, i32) {
    %c0_i32 = arith.constant 0 : i32
    %c0_i32_0 = arith.constant 0 : i32
    %c0_i32_1 = arith.constant 0 : i32
    return %c0_i32, %c0_i32_0 : i32, i32
  }
  func.func @transform_3(%arg0: i32) -> (i32, i32) {
    %c0_i32 = arith.constant 0 : i32
    %c0_i32_0 = arith.constant 0 : i32
    %c0_i32_1 = arith.constant 0 : i32
    return %c0_i32, %c0_i32_0 : i32, i32
  }
  func.func @transform_4(%arg0: i32) -> (i32, i32) {
    %c0_i32 = arith.constant 0 : i32
    %c0_i32_0 = arith.constant 0 : i32
    %c0_i32_1 = arith.constant 0 : i32
    return %c0_i32, %c0_i32_0 : i32, i32
  }
  func.func @transform_5(%arg0: i32) -> (i32, i32) {
    %c0_i32 = arith.constant 0 : i32
    %c0_i32_0 = arith.constant 0 : i32
    %c0_i32_1 = arith.constant 0 : i32
    return %c0_i32, %c0_i32_0 : i32, i32
  }
  func.func @transform_6(%arg0: i32) -> (i32, i32) {
    %c0_i32 = arith.constant 0 : i32
    %c0_i32_0 = arith.constant 0 : i32
    %c0_i32_1 = arith.constant 0 : i32
    return %c0_i32, %c0_i32_0 : i32, i32
  }
  func.func @transform_7(%arg0: i32) -> (i32, i32) {
    %c0_i32 = arith.constant 0 : i32
    %c0_i32_0 = arith.constant 0 : i32
    %c0_i32_1 = arith.constant 0 : i32
    return %c0_i32, %c0_i32_0 : i32, i32
  }
  func.func @transform_8(%arg0: i32) -> (i32, i32) {
    %c0_i32 = arith.constant 0 : i32
    %c0_i32_0 = arith.constant 0 : i32
    return %arg0, %c0_i32 : i32, i32
  }
  func.func @transform_9(%arg0: i32) -> (i32, i32) {
    %c0_i32 = arith.constant 0 : i32
    %c0_i32_0 = arith.constant 0 : i32
    return %arg0, %c0_i32 : i32, i32
  }
}

</mosaic_0001>

<llo_original>
// kernel: tpu_custom_call.1
$region0: #{tpu_custom_call.1}
  #allocation0 [shape = 'u32[]', space=smem, size = 0x4, offset = 0x4, fixed_abs, tag = 'smem constant byte address 0x4 - core index']
  #allocation1 [shape = 'u32[72,128]{1,0:T(1,128)}', space=vmem, size = 0x9000, scoped, tag = 'internal scratch']
  %s0 = inlined_call_operand.hbm [shape: f32[16,32], index: 0, kind: input, shape index: {}]
  %s1 = inlined_call_operand.hbm [shape: f32[16,32], index: 1, kind: input, shape index: {}]
  %s2 = inlined_call_operand.hbm [shape: bf16[32,64], index: 2, kind: input, shape index: {}]
  %s3 = inlined_call_operand.vmem [shape: f32[1,64], index: 3, kind: input, shape index: {}]
  %s4 = inlined_call_operand.hbm [shape: bf16[64,256], index: 4, kind: input, shape index: {}]
  %s5 = inlined_call_operand.vmem [shape: f32[1,256], index: 5, kind: input, shape index: {}]
  %s6 = inlined_call_operand.hbm [shape: bf16[32,128], index: 6, kind: input, shape index: {}]
  %s7 = inlined_call_operand.vmem [shape: f32[1,128], index: 7, kind: input, shape index: {}]
  %s8 = inlined_call_operand.hbm [shape: f32[8,32], index: 8, kind: output, shape index: {0}]
  %s9 = inlined_call_operand.hbm [shape: bf16[16,128], index: 9, kind: output, shape index: {1}]
  %10 = xla_tuple %s8, %s9
  %s11 = sld [smem:[#allocation0]]
  $region70: #{tpu_custom_call.1} parent=0
    _
  %s13 = ssub.s32 1, %s11
  %s14 = scalar_select 0, %s13, %s11
  $region1: #{tpu_custom_call.1} parent=0
    #allocation2 [shape = 'u8[8192]{0}', space=vmem, size = 0x2000, scoped, tag = 'input window, operand 0, single buffered']
    #allocation3 [shape = 's32[1]{0}', space=sflag, size = 0x4, scoped, tag = 'scoped memory for tpu_custom_call.1']
    #allocation4 [shape = 's32[1]{0}', space=sflag, size = 0x4, scoped, tag = 'scoped memory for tpu_custom_call.1']
    #allocation5 [shape = 'u8[8192]{0}', space=vmem, size = 0x2000, scoped, tag = 'input window, operand 1, single buffered']
    #allocation6 [shape = 's32[1]{0}', space=sflag, size = 0x4, scoped, tag = 'scoped memory for tpu_custom_call.1']
    #allocation7 [shape = 'u8[8192]{0}', space=vmem, size = 0x2000, scoped, tag = 'input window, operand 2, single buffered']
    #allocation8 [shape = 'u8[32768]{0}', space=vmem, size = 0x8000, scoped, tag = 'input window, operand 4, single buffered']
    #allocation9 [shape = 's32[1]{0}', space=sflag, size = 0x4, scoped, tag = 'scoped memory for tpu_custom_call.1']
    #allocation10 [shape = 'u8[8192]{0}', space=vmem, size = 0x2000, scoped, tag = 'input window, operand 6, single buffered']
    #allocation11 [shape = 'u8[4096]{0}', space=vmem, size = 0x1000, scoped, tag = 'output window, operand 0, single buffered']
    #allocation12 [shape = 'u8[4096]{0}', space=vmem, size = 0x1000, scoped, tag = 'output window, operand 1, single buffered']
    #allocation13 [shape = 's32[1]{0}', space=sflag, size = 0x4, scoped, tag = 'scoped memory for tpu_custom_call.1']
    %15 = vsyncpa [#allocation3], 0
    %16 = vsyncpa [#allocation6], 0
    %17 = vsyncpa [#allocation9], 0
    %18 = vsyncpa [#allocation4], 0
    %19 = vsyncpa [#allocation13], 0
    // Predicated region
    $region2: #{tpu_custom_call.1} parent=1 // pred_check
      _
    $region3: #{tpu_custom_call.1} parent=1 // pred_check_branch
      %21 = sbr.rel (0) target = $region5
    $region4: #{tpu_custom_call.1} parent=1 // pred_region
      %23 = vsyncadd [#allocation3], 0
      %s24 = sshll.u32 %s0, 4
      %s25 = int_to_ptr.hbm [resolvable:$true] %s24
      %s26 = sshll.u32 [#allocation2], 4
      %s27 = int_to_ptr.vmem [resolvable:$true] %s26
      %32 = dma.hbm_to_vmem [thread:$0]  %s25, 256, %s27, [#allocation3], 128, 128, 8
    $region5: #{tpu_custom_call.1} parent=1 // pred_fallthru
      _
    // Predicated region
    $region6: #{tpu_custom_call.1} parent=1 // pred_check
      _
    $region7: #{tpu_custom_call.1} parent=1 // pred_check_branch
      %34 = sbr.rel (0) target = $region9
    $region8: #{tpu_custom_call.1} parent=1 // pred_region
      %36 = vsyncadd [#allocation6], 0
      %s37 = sshll.u32 %s1, 4
      %s38 = int_to_ptr.hbm [resolvable:$true] %s37
      %s39 = sshll.u32 [#allocation5], 4
      %s40 = int_to_ptr.vmem [resolvable:$true] %s39
      %45 = dma.hbm_to_vmem [thread:$0]  %s38, 256, %s40, [#allocation6], 128, 128, 8
    $region9: #{tpu_custom_call.1} parent=1 // pred_fallthru
      _
    // Predicated region
    $region10: #{tpu_custom_call.1} parent=1 // pred_check
      _
    $region11: #{tpu_custom_call.1} parent=1 // pred_check_branch
      %47 = sbr.rel (0) target = $region13
    $region12: #{tpu_custom_call.1} parent=1 // pred_region
      %49 = vsyncadd [#allocation6], 0
      %s50 = sshll.u32 %s2, 4
      %s51 = int_to_ptr.hbm [resolvable:$true] %s50
      %s52 = sshll.u32 [#allocation7], 4
      %s53 = int_to_ptr.vmem [resolvable:$true] %s52
      %58 = dma.hbm_to_vmem [thread:$0]  %s51, 256, %s53, [#allocation6], 64, 64, 4
    $region13: #{tpu_custom_call.1} parent=1 // pred_fallthru
      _
    // Predicated region
    $region14: #{tpu_custom_call.1} parent=1 // pred_check
      _
    $region15: #{tpu_custom_call.1} parent=1 // pred_check_branch
      %60 = sbr.rel (0) target = $region17
    $region16: #{tpu_custom_call.1} parent=1 // pred_region
      _
    $region17: #{tpu_custom_call.1} parent=1 // pred_fallthru
      _
    // Predicated region
    $region18: #{tpu_custom_call.1} parent=1 // pred_check
      _
    $region19: #{tpu_custom_call.1} parent=1 // pred_check_branch
      %62 = sbr.rel (0) target = $region21
    $region20: #{tpu_custom_call.1} parent=1 // pred_region
      %64 = vsyncadd [#allocation9], 0
      %s65 = sshll.u32 %s4, 4
      %s66 = int_to_ptr.hbm [resolvable:$true] %s65
      %s67 = sshll.u32 [#allocation8], 4
      %s68 = int_to_ptr.vmem [resolvable:$true] %s67
      %73 = dma.hbm_to_vmem [thread:$0]  %s66, 1024, %s68, [#allocation9], 128, 128, 8
    $region21: #{tpu_custom_call.1} parent=1 // pred_fallthru
      _
    // Predicated region
    $region22: #{tpu_custom_call.1} parent=1 // pred_check
      _
    $region23: #{tpu_custom_call.1} parent=1 // pred_check_branch
      %75 = sbr.rel (0) target = $region25
    $region24: #{tpu_custom_call.1} parent=1 // pred_region
      _
    $region25: #{tpu_custom_call.1} parent=1 // pred_fallthru
      _
    // Predicated region
    $region26: #{tpu_custom_call.1} parent=1 // pred_check
      _
    $region27: #{tpu_custom_call.1} parent=1 // pred_check_branch
      %77 = sbr.rel (0) target = $region29
    $region28: #{tpu_custom_call.1} parent=1 // pred_region
      %79 = vsyncadd [#allocation9], 0
      %s80 = sshll.u32 %s6, 4
      %s81 = int_to_ptr.hbm [resolvable:$true] %s80
      %s82 = sshll.u32 [#allocation10], 4
      %s83 = int_to_ptr.vmem [resolvable:$true] %s82
      %88 = dma.hbm_to_vmem [thread:$0]  %s81, 256, %s83, [#allocation9], 64, 64, 4
    $region29: #{tpu_custom_call.1} parent=1 // pred_fallthru
      _
    // Predicated region
    $region30: #{tpu_custom_call.1} parent=1 // pred_check
      _
    $region31: #{tpu_custom_call.1} parent=1 // pred_check_branch
      %90 = sbr.rel (0) target = $region33
    $region32: #{tpu_custom_call.1} parent=1 // pred_region
      _
    $region33: #{tpu_custom_call.1} parent=1 // pred_fallthru
      _
    // Predicated region
    $region34: #{tpu_custom_call.1} parent=1 // pred_check
      _
    $region35: #{tpu_custom_call.1} parent=1 // pred_check_branch
      %92 = sbr.rel (0) target = $region37
    $region36: #{tpu_custom_call.1} parent=1 // pred_region
      %94 = dma.done [#allocation3], 256
    $region37: #{tpu_custom_call.1} parent=1 // pred_fallthru
      _
    // Predicated region
    $region38: #{tpu_custom_call.1} parent=1 // pred_check
      _
    $region39: #{tpu_custom_call.1} parent=1 // pred_check_branch
      %96 = sbr.rel (0) target = $region41
    $region40: #{tpu_custom_call.1} parent=1 // pred_region
      %98 = dma.done [#allocation6], 256
    $region41: #{tpu_custom_call.1} parent=1 // pred_fallthru
      _
    // Predicated region
    $region42: #{tpu_custom_call.1} parent=1 // pred_check
      _
    $region43: #{tpu_custom_call.1} parent=1 // pred_check_branch
      %100 = sbr.rel (0) target = $region45
    $region44: #{tpu_custom_call.1} parent=1 // pred_region
      %102 = dma.done [#allocation6], 256
    $region45: #{tpu_custom_call.1} parent=1 // pred_fallthru
      _
    // Predicated region
    $region46: #{tpu_custom_call.1} parent=1 // pred_check
      _
    $region47: #{tpu_custom_call.1} parent=1 // pred_check_branch
      %104 = sbr.rel (0) target = $region49
    $region48: #{tpu_custom_call.1} parent=1 // pred_region
      %106 = dma.done [#allocation9], 1024
    $region49: #{tpu_custom_call.1} parent=1 // pred_fallthru
      _
    // Predicated region
    $region50: #{tpu_custom_call.1} parent=1 // pred_check
      _
    $region51: #{tpu_custom_call.1} parent=1 // pred_check_branch
      %108 = sbr.rel (0) target = $region53
    $region52: #{tpu_custom_call.1} parent=1 // pred_region
      %110 = dma.done [#allocation9], 256
    $region53: #{tpu_custom_call.1} parent=1 // pred_fallthru
      _
    %v112 = vld [vmem:[#allocation2] sm:$0xff]
    %v113 = vld [vmem:[#allocation2 + $0x8] sm:$0xff]
    %v114 = vpack.c.bf16 %v113, %v112
    %v115 = vld [vmem:[#allocation5] sm:$0xff]
    %v116 = vld [vmem:[#allocation5 + $0x8] sm:$0xff]
    %v117 = vld [vmem:[#allocation7] sm:$0xf]
    %v118 = vld [vmem:[#allocation7 + $0x4] sm:$0xf]
    %v119 = vld [vmem:[#allocation7 + $0x8] sm:$0xf]
    %v120 = vld [vmem:[#allocation7 + $0xc] sm:$0xf]
    %v121 = vld [vmem:[%s3] sm:$0x1]
    %v123 = vperm.slane %v121, 0
    %v129 = vunpack.c.l.b16 %v117
    %v130 = vunpack.c.l.b16 %v118
    %v131 = vunpack.c.l.b16 %v119
    %v132 = vunpack.c.l.b16 %v120
    %v133 = vpack.c.b16 %v130, %v129
    %v134 = vpack.c.b16 %v132, %v131
    %vm137 = vcmask 261120
    %v139 = vsel %vm137, %v114, 0
    %141 = vmatpush.bf16.msra.mxu0 0
    %142 = vmatpush.bf16.msra.mxu0 0
    %143 = vmatpush.bf16.msra.mxu0 0
    %144 = vmatpush.bf16.msra.mxu0 0
    %145 = vmatpush.bf16.msra.mxu0 0
    %146 = vmatpush.bf16.msra.mxu0 0
    %147 = vmatpush.bf16.msra.mxu0 %v134
    %148 = vmatpush.bf16.msra.mxu0 %v133
    %149 = vmatmul.bf16.gmra.mxu0 %v139
    %v150 = vpop.f32.mrf.mxu0
    %v151 = vadd.f32 %v123, %v150
    %v152 = vpop.f32.mrf.mxu0
    %v153 = vadd.f32 %v123, %v152
    %154 = vdwg.mxu0
    %v155 = vmax.f32 %v151, 0.0
    %v156 = vmax.f32 %v153, 0.0
    %v157 = vpack.c.bf16 %v156, %v155
    %v158 = vld [vmem:[#allocation8] sm:$0xff]
    %v159 = vld [vmem:[#allocation8 + $0x8] sm:$0xff]
    %v160 = vld [vmem:[#allocation8 + $0x10] sm:$0xff]
    %v161 = vld [vmem:[#allocation8 + $0x18] sm:$0xff]
    %v162 = vld [vmem:[#allocation8 + $0x20] sm:$0xff]
    %v163 = vld [vmem:[#allocation8 + $0x28] sm:$0xff]
    %v164 = vld [vmem:[#allocation8 + $0x30] sm:$0xff]
    %v165 = vld [vmem:[#allocation8 + $0x38] sm:$0xff]
    %v166 = vld [vmem:[%s5] sm:$0x3]
    %v168 = vperm.slane %v166, 0
    %v169 = vperm.slane %v166, 1
    %v180 = vunpack.c.l.b16 %v158
    %v181 = vunpack.c.h.b16 %v158
    %v182 = vunpack.c.l.b16 %v159
    %v183 = vunpack.c.h.b16 %v159
    %v184 = vunpack.c.l.b16 %v160
    %v185 = vunpack.c.h.b16 %v160
    %v186 = vunpack.c.l.b16 %v161
    %v187 = vunpack.c.h.b16 %v161
    %v188 = vunpack.c.l.b16 %v162
    %v189 = vunpack.c.h.b16 %v162
    %v190 = vunpack.c.l.b16 %v163
    %v191 = vunpack.c.h.b16 %v163
    %v192 = vunpack.c.l.b16 %v164
    %v193 = vunpack.c.h.b16 %v164
    %v194 = vunpack.c.l.b16 %v165
    %v195 = vunpack.c.h.b16 %v165
    %v196 = vpack.c.b16 %v182, %v180
    %v197 = vpack.c.b16 %v183, %v181
    %v198 = vpack.c.b16 %v186, %v184
    %v199 = vpack.c.b16 %v187, %v185
    %v200 = vpack.c.b16 %v190, %v188
    %v201 = vpack.c.b16 %v191, %v189
    %v202 = vpack.c.b16 %v194, %v192
    %v203 = vpack.c.b16 %v195, %v193
    %vm212 = vcmask 523264
    %v214 = vsel %vm212, %v157, 0
    %216 = vmatpush.bf16.msra.mxu0 0
    %217 = vmatpush.bf16.msra.mxu0 0
    %218 = vmatpush.bf16.msra.mxu0 0
    %219 = vmatpush.bf16.msra.mxu0 0
    %220 = vmatpush.bf16.msra.mxu0 %v202
    %221 = vmatpush.bf16.msra.mxu0 %v200
    %222 = vmatpush.bf16.msra.mxu0 %v198
    %223 = vmatpush.bf16.msra.mxu0 %v196
    %224 = vmatmul.bf16.gmra.mxu0 %v214
    %v225 = vpop.f32.mrf.mxu0
    %v226 = vadd.f32 %v168, %v225
    %v227 = vpop.f32.mrf.mxu0
    %v228 = vadd.f32 %v168, %v227
    %229 = vdwg.mxu0
    %230 = vmatpush.bf16.msra.mxu0 0
    %231 = vmatpush.bf16.msra.mxu0 0
    %232 = vmatpush.bf16.msra.mxu0 0
    %233 = vmatpush.bf16.msra.mxu0 0
    %234 = vmatpush.bf16.msra.mxu0 %v203
    %235 = vmatpush.bf16.msra.mxu0 %v201
    %236 = vmatpush.bf16.msra.mxu0 %v199
    %237 = vmatpush.bf16.msra.mxu0 %v197
    %238 = vmatmul.bf16.gmra.mxu0 %v214
    %v239 = vpop.f32.mrf.mxu0
    %v240 = vadd.f32 %v169, %v239
    %v241 = vpop.f32.mrf.mxu0
    %v242 = vadd.f32 %v169, %v241
    %243 = vdwg.mxu0
    %v244 = vsub.f32 %v226, %v115
    %v245 = vsub.f32 %v228, %v116
    %v246 = vmul.f32 %v244, %v244
    %v247 = vmul.f32 %v245, %v245
    %v248 = vsub.f32 0.0, %v246
    %v249 = vsub.f32 0.0, %v247
    %v250 = vmul.f32 %v248, 0.5
    %v251 = vmul.f32 %v249, 0.5
    %v252 = vsub.f32 0.0, %v240
    %v253 = vsub.f32 0.0, %v242
    %v254 = vmul.f32 %v252, 1.442695
    %v255 = vpow.pop %v254
    %v256 = vmul.f32 %v253, 1.442695
    %v257 = vpow.pop %v256
    %v258 = vmul.f32 %v250, %v255
    %v259 = vmul.f32 %v251, %v257
    %s260 = smul.u32 0, 16
    %v261 = vlaneseq
    %v262 = vshrl.u32 %v261, 7
    %v263 = vadd.s32 %v262, 8
    %v264 = vstv %s260
    %v265 = vadd.s32 %v264, %v262
    %v266 = vadd.s32 %v264, %v263
    %vm267 = vcmp.lt.s32.totalorder %v265, 8
    %vm268 = vcmp.lt.s32.totalorder %v266, 8
    %v269 = vsel %vm267, 1, 0
    %v270 = vsel %vm268, 1, 0
    %vm271 = vcmp.eq.s32.totalorder %v269, 1
    %vm272 = vcmp.eq.s32.totalorder %v270, 1
    %v273 = vsel %vm271, %v258, 0.0
    %v274 = vsel %vm272, %v259, 0.0
    %v275 = vadd.f32 %v273, %v274
    %276 = vst.msk [vmem:[#allocation11] sm:$0xff] %vm137, %v275
    %v277 = vpack.c.bf16 %v116, %v115
    %v278 = vld [vmem:[#allocation10] sm:$0xf]
    %v279 = vld [vmem:[#allocation10 + $0x4] sm:$0xf]
    %v280 = vld [vmem:[#allocation10 + $0x8] sm:$0xf]
    %v281 = vld [vmem:[#allocation10 + $0xc] sm:$0xf]
    %v282 = vld [vmem:[%s7] sm:$0x1]
    %v284 = vperm.slane %v282, 0
    %v290 = vunpack.c.l.b16 %v278
    %v291 = vunpack.c.l.b16 %v279
    %v292 = vunpack.c.l.b16 %v280
    %v293 = vunpack.c.l.b16 %v281
    %v294 = vpack.c.b16 %v291, %v290
    %v295 = vpack.c.b16 %v293, %v292
    %v299 = vsel %vm137, %v277, 0
    %301 = vmatpush.bf16.msra.mxu0 0
    %302 = vmatpush.bf16.msra.mxu0 0
    %303 = vmatpush.bf16.msra.mxu0 0
    %304 = vmatpush.bf16.msra.mxu0 0
    %305 = vmatpush.bf16.msra.mxu0 0
    %306 = vmatpush.bf16.msra.mxu0 0
    %307 = vmatpush.bf16.msra.mxu0 %v295
    %308 = vmatpush.bf16.msra.mxu0 %v294
    %309 = vmatmul.bf16.gmra.mxu0 %v299
    %v310 = vpop.f32.mrf.mxu0
    %v311 = vadd.f32 %v284, %v310
    %v312 = vpop.f32.mrf.mxu0
    %v313 = vadd.f32 %v284, %v312
    %314 = vdwg.mxu0
    %v315 = vtanh.pop %v311
    %v316 = vtanh.pop %v313
    %v317 = vpack.c.bf16 %v315, %v315
    %v318 = vpack.c.bf16 %v316, %v316
    %319 = vst [vmem:[#allocation12] sm:$0xf] %v317
    %320 = vst [vmem:[#allocation12 + $0x4] sm:$0xf] %v318
    // Predicated region
    $region54: #{tpu_custom_call.1} parent=1 // pred_check
      _
    $region55: #{tpu_custom_call.1} parent=1 // pred_check_branch
      %322 = sbr.rel (0) target = $region57
    $region56: #{tpu_custom_call.1} parent=1 // pred_region
      %324 = vsyncadd [#allocation4], 0
      %s326 = sshll.u32 [#allocation11], 4
      %s327 = int_to_ptr.vmem [resolvable:$true] %s326
      %s328 = sshll.u32 %s8, 4
      %s329 = int_to_ptr.hbm [resolvable:$true] %s328
      %331 = dma.vmem_to_hbm [thread:$0]  %s327, 128, %s329, [#allocation4]
    $region57: #{tpu_custom_call.1} parent=1 // pred_fallthru
      _
    // Predicated region
    $region58: #{tpu_custom_call.1} parent=1 // pred_check
      _
    $region59: #{tpu_custom_call.1} parent=1 // pred_check_branch
      %333 = sbr.rel (0) target = $region61
    $region60: #{tpu_custom_call.1} parent=1 // pred_region
      %335 = vsyncadd [#allocation13], 0
      %s336 = sshll.u32 [#allocation12], 4
      %s337 = int_to_ptr.vmem [resolvable:$true] %s336
      %s338 = sshll.u32 %s9, 4
      %s339 = int_to_ptr.hbm [resolvable:$true] %s338
      %344 = dma.vmem_to_hbm [thread:$0]  %s337, 128, %s339, [#allocation13], 64, 64, 4
    $region61: #{tpu_custom_call.1} parent=1 // pred_fallthru
      _
    // Predicated region
    $region62: #{tpu_custom_call.1} parent=1 // pred_check
      _
    $region63: #{tpu_custom_call.1} parent=1 // pred_check_branch
      %346 = sbr.rel (0) target = $region65
    $region64: #{tpu_custom_call.1} parent=1 // pred_region
      %348 = dma.done [#allocation4], 128
    $region65: #{tpu_custom_call.1} parent=1 // pred_fallthru
      _
    // Predicated region
    $region66: #{tpu_custom_call.1} parent=1 // pred_check
      _
    $region67: #{tpu_custom_call.1} parent=1 // pred_check_branch
      %350 = sbr.rel (0) target = $region69
    $region68: #{tpu_custom_call.1} parent=1 // pred_region
      %352 = dma.done [#allocation13], 128
    $region69: #{tpu_custom_call.1} parent=1 // pred_fallthru
      _
    %353 = vsyncpa [#allocation3], 1
    %354 = vsyncpa [#allocation6], 1
    %355 = vsyncpa [#allocation9], 1
    %356 = vsyncpa [#allocation4], 1
    %357 = vsyncpa [#allocation13], 1

</llo_original>
